<compile_context>
chip_gen: v6e
topology: v6e:2x2x1
jax: 0.10.0
libtpu: 0.0.40
codegen_flags: <defaults>
</compile_context>

<pallas_src>
import functools

import jax
import jax.numpy as jnp
from jax import lax
from jax.experimental import pallas as pl
from jax.experimental.pallas import tpu as pltpu


def _round_up(n, m):
    return ((n + m - 1) // m) * m


def _choose_block_b(batch, preferred=512):
    """Pick the batch tile: big enough to amortize per-grid-step overhead,
    small enough to keep >= 2 grid steps (so both v7x TensorCores get work)
    whenever the batch allows it."""
    target = _round_up(max(batch, 1), 8)
    if target < 16:
        return target
    n_tiles = max(2, pl.cdiv(target, preferred))
    return _round_up(pl.cdiv(target, n_tiles), 8)


def _mlp_kernel(x_ref, w1_ref, b1_ref, w2_ref, b2_ref, w3_ref, b3_ref, out_ref,
                *, sub_rows=128):
    """Fused 3-layer MLP on one (TB, in_dim) batch tile; weights are resident.

    The tile is processed in `sub_rows`-row chunks so the f32 intermediates of
    each chunk's Linear->ReLU chain stay within the vreg file even for large
    BlockSpec tiles.
    """
    block_rows = out_ref.shape[0]
    cdtype = x_ref.dtype

    # Hoist the (VMEM-resident) weight/bias loads out of the sub-tile loop.
    w1 = w1_ref[...]
    b1 = b1_ref[...]
    w2 = w2_ref[...]
    b2 = b2_ref[...]
    w3 = w3_ref[...]
    b3 = b3_ref[...]

    def compute_rows(r0, nrows):
        x = x_ref[pl.ds(r0, nrows), :]
        # Layer 1: Linear + ReLU (f32 accumulation, bf16 feed to next MXU op).
        h1 = jnp.dot(x, w1, preferred_element_type=jnp.float32) + b1
        h1 = jnp.maximum(h1, 0.0).astype(cdtype)
        # Layer 2: Linear + ReLU.
        h2 = jnp.dot(h1, w2, preferred_element_type=jnp.float32) + b2
        h2 = jnp.maximum(h2, 0.0).astype(cdtype)
        # Layer 3: Linear, no activation (final ReLU was popped in the module).
        y = jnp.dot(h2, w3, preferred_element_type=jnp.float32) + b3
        out_ref[pl.ds(r0, nrows), :] = y.astype(out_ref.dtype)

    n_full = block_rows // sub_rows
    if n_full > 0:
        def body(i, carry):
            compute_rows(pl.multiple_of(i * sub_rows, sub_rows), sub_rows)
            return carry
        lax.fori_loop(0, n_full, body, 0, unroll=True)

    rem = block_rows - n_full * sub_rows
    if rem:
        compute_rows(n_full * sub_rows, rem)


def prepare_params(params, *, compute_dtype=jnp.bfloat16):
    """One-time weight prep, hoisted out of the per-call forward path.

    Pads hidden dims to multiples of 128 (exact: padded units see zero
    weights/biases), keeps the final output dim UNPADDED, casts weights to the
    MXU compute dtype, and reshapes biases to (1, N) f32 rows.
    """
    w1, b1, w2, b2, w3, b3 = params
    in_dim = w1.shape[0]
    h1p = _round_up(w1.shape[1], 128)
    h2p = _round_up(w2.shape[1], 128)
    out_dim = w3.shape[1]   # NOT padded: output is stored unpadded.

    def pad2(a, rows, cols):
        return jnp.pad(a, ((0, rows - a.shape[0]), (0, cols - a.shape[1])))

    w1p = pad2(w1, in_dim, h1p).astype(compute_dtype)
    w2p = pad2(w2, h1p, h2p).astype(compute_dtype)
    w3p = pad2(w3, h2p, out_dim).astype(compute_dtype)
    b1p = pad2(b1.reshape(1, -1), 1, h1p).astype(jnp.float32)
    b2p = pad2(b2.reshape(1, -1), 1, h2p).astype(jnp.float32)
    b3p = b3.reshape(1, -1).astype(jnp.float32)
    return (w1p, b1p, w2p, b2p, w3p, b3p)


def linear_parameterizer_forward(x, prepared, num_concepts, num_classes,
                                 *, block_b=512, compute_dtype=jnp.bfloat16):
    """Batch-tiled fused MLP kernel -> (B, num_concepts, num_classes)."""
    w1p, b1p, w2p, b2p, w3p, b3p = prepared
    batch, in_dim = x.shape
    assert w1p.shape[0] == in_dim
    h1p, h2p, out_dim = w1p.shape[1], w2p.shape[1], w3p.shape[1]
    assert out_dim == num_concepts * num_classes

    bb = _choose_block_b(batch, block_b)
    bp = _round_up(batch, bb)
    nb = bp // bb

    xp = x.astype(compute_dtype)
    if bp != batch:
        # Padded rows compute relu(bias) garbage and are discarded below.
        xp = jnp.pad(xp, ((0, bp - batch), (0, 0)))

    # Sub-tile the kernel body in 128-row chunks when the tile allows it;
    # otherwise (small / odd tiles) process the whole tile in one chunk.
    sub_rows = 128 if bb % 128 == 0 else bb
    kernel = functools.partial(_mlp_kernel, sub_rows=sub_rows)

    y = pl.pallas_call(
        kernel,
        out_shape=jax.ShapeDtypeStruct((bp, out_dim), jnp.float32),
        grid=(nb,),
        in_specs=[
            # x: tiled over the batch grid axis (double-buffered by Pallas);
            # feature dim left unpadded (cheap stream, MXU pads K internally).
            pl.BlockSpec((bb, in_dim), lambda i: (i, 0)),
            # Weights / biases: constant block index -> VMEM-resident.
            pl.BlockSpec((in_dim, h1p), lambda i: (0, 0)),
            pl.BlockSpec((1, h1p), lambda i: (0, 0)),
            pl.BlockSpec((h1p, h2p), lambda i: (0, 0)),
            pl.BlockSpec((1, h2p), lambda i: (0, 0)),
            pl.BlockSpec((h2p, out_dim), lambda i: (0, 0)),
            pl.BlockSpec((1, out_dim), lambda i: (0, 0)),
        ],
        # Unpadded output: masked vst, but ~13x fewer HBM writeback bytes and
        # no post-kernel column-slice pass.
        out_specs=pl.BlockSpec((bb, out_dim), lambda i: (i, 0)),
        compiler_params=pltpu.CompilerParams(
            dimension_semantics=("parallel",)),
    )(xp, w1p, b1p, w2p, b2p, w3p, b3p)

    if bp != batch:
        y = y[:batch]
    return y.reshape(batch, num_concepts, num_classes)


def init_params(key, hidden_sizes):
    """Deterministic init mimicking nn.Linear default (uniform +/- 1/sqrt(fan_in))."""
    params = []
    for h, h_next in zip(hidden_sizes, hidden_sizes[1:]):
        key, kw, kb = jax.random.split(key, 3)
        bound = 1.0 / jnp.sqrt(jnp.float32(h))
        w = jax.random.uniform(kw, (h, h_next), jnp.float32, -bound, bound)
        b = jax.random.uniform(kb, (h_next,), jnp.float32, -bound, bound)
        params.extend([w, b])
    return tuple(params)


def reference_forward(x, params, num_concepts, num_classes,
                      compute_dtype=jnp.float32):
    """Pure-JAX reference (optionally with the same bf16 compute cast)."""
    w1, b1, w2, b2, w3, b3 = params

    def lin(h, w, b):
        return jnp.dot(h.astype(compute_dtype), w.astype(compute_dtype),
                       preferred_element_type=jnp.float32) + b

    h1 = jnp.maximum(lin(x, w1, b1), 0.0)
    h2 = jnp.maximum(lin(h1, w2, b2), 0.0)
    y = lin(h2, w3, b3)
    return y.reshape(x.shape[0], num_concepts, num_classes)


if __name__ == "__main__":
    num_concepts = 5
    num_classes = 2
    hidden_sizes = (10, 5, 5, 10)   # last layer size = num_concepts * num_classes
    batch = 256                     # -> two 128-row tiles (both v7x TCs busy)

    key = jax.random.PRNGKey(0)
    key, kx = jax.random.split(key)
    x = jax.random.normal(kx, (batch, hidden_sizes[0]), jnp.float32)
    params = init_params(key, hidden_sizes)

    # One-time weight prep, hoisted out of the jitted forward.
    prepared = prepare_params(params)

    fwd = jax.jit(functools.partial(
        linear_parameterizer_forward,
        num_concepts=num_concepts, num_classes=num_classes))
    out = jax.block_until_ready(fwd(x, prepared))
    assert out.shape == (batch, num_concepts, num_classes)

    # Apples-to-apples check (same bf16 casts, f32 accumulation).
    ref_bf16 = reference_forward(x, params, num_concepts, num_classes,
                                 compute_dtype=jnp.bfloat16)
    assert jnp.allclose(out, ref_bf16, atol=1e-3, rtol=1e-3)

    # Module semantics in full f32 (loose tolerance for the bf16 compute cast).
    ref_f32 = reference_forward(x, params, num_concepts, num_classes)
    assert jnp.allclose(out, ref_f32, atol=5e-2, rtol=5e-2)

    print("KERNEL_OK")
</pallas_src>

<mosaic_0001>
module attributes {stable_mosaic.version = 11 : i64} {
  func.func @_mlp_kernel(%arg0: i32, %arg1: memref<128x10xbf16, #tpu.memory_space<vmem>>, %arg2: memref<10x128xbf16, #tpu.memory_space<vmem>>, %arg3: memref<1x128xf32, #tpu.memory_space<vmem>>, %arg4: memref<128x128xbf16, #tpu.memory_space<vmem>>, %arg5: memref<1x128xf32, #tpu.memory_space<vmem>>, %arg6: memref<128x10xbf16, #tpu.memory_space<vmem>>, %arg7: memref<1x10xf32, #tpu.memory_space<vmem>>, %arg8: memref<128x10xf32, #tpu.memory_space<vmem>>) attributes {dimension_semantics = [#tpu.dimension_semantics<parallel>], iteration_bounds = array<i64: 2>, scalar_prefetch = 0 : i64, scratch_operands = 0 : i64, tpu.core_type = #tpu.core_type<tc>, window_params = [{transform_indices = @transform_0, window_bounds = array<i64: 128, 10>}, {pipeline_mode = #tpu.pipeline_mode<synchronous>, transform_indices = @transform_1, window_bounds = array<i64: 10, 128>}, {pipeline_mode = #tpu.pipeline_mode<synchronous>, transform_indices = @transform_2, window_bounds = array<i64: 1, 128>}, {pipeline_mode = #tpu.pipeline_mode<synchronous>, transform_indices = @transform_3, window_bounds = array<i64: 128, 128>}, {pipeline_mode = #tpu.pipeline_mode<synchronous>, transform_indices = @transform_4, window_bounds = array<i64: 1, 128>}, {pipeline_mode = #tpu.pipeline_mode<synchronous>, transform_indices = @transform_5, window_bounds = array<i64: 128, 10>}, {pipeline_mode = #tpu.pipeline_mode<synchronous>, transform_indices = @transform_6, window_bounds = array<i64: 1, 10>}, {transform_indices = @transform_7, window_bounds = array<i64: 128, 10>}]} {
    %c0 = arith.constant 0 : index
    %c0_0 = arith.constant 0 : index
    %0 = vector.load %arg2[%c0, %c0_0] : memref<10x128xbf16, #tpu.memory_space<vmem>>, vector<10x128xbf16>
    %c0_1 = arith.constant 0 : index
    %c0_2 = arith.constant 0 : index
    %1 = vector.load %arg3[%c0_1, %c0_2] : memref<1x128xf32, #tpu.memory_space<vmem>>, vector<1x128xf32>
    %c0_3 = arith.constant 0 : index
    %c0_4 = arith.constant 0 : index
    %2 = vector.load %arg4[%c0_3, %c0_4] : memref<128x128xbf16, #tpu.memory_space<vmem>>, vector<128x128xbf16>
    %c0_5 = arith.constant 0 : index
    %c0_6 = arith.constant 0 : index
    %3 = vector.load %arg5[%c0_5, %c0_6] : memref<1x128xf32, #tpu.memory_space<vmem>>, vector<1x128xf32>
    %c0_7 = arith.constant 0 : index
    %c0_8 = arith.constant 0 : index
    %4 = vector.load %arg6[%c0_7, %c0_8] : memref<128x10xbf16, #tpu.memory_space<vmem>>, vector<128x10xbf16>
    %c0_9 = arith.constant 0 : index
    %c0_10 = arith.constant 0 : index
    %5 = vector.load %arg7[%c0_9, %c0_10] : memref<1x10xf32, #tpu.memory_space<vmem>>, vector<1x10xf32>
    %c0_i32 = arith.constant 0 : i32
    %c128_i32 = arith.constant 128 : i32
    %6 = arith.muli %c0_i32, %c128_i32 : i32
    %7 = tpu.assume_multiple %6, 128 : i32
    %8 = arith.index_cast %7 : i32 to index
    %c0_11 = arith.constant 0 : index
    %9 = vector.load %arg1[%8, %c0_11] : memref<128x10xbf16, #tpu.memory_space<vmem>>, vector<128x10xbf16>
    %cst = arith.constant dense<0.000000e+00> : vector<128x128xf32>
    %10 = tpu.matmul %9, %0, %cst {dimension_numbers = #tpu.dot_dimension_numbers<[1], [0], [0], [1], [0, 0, 1, 1], [], []>} : vector<128x10xbf16>, vector<10x128xbf16>, vector<128x128xf32> -> vector<128x128xf32>
    %11 = vector.broadcast %1 : vector<1x128xf32> to vector<128x128xf32>
    %12 = arith.addf %10, %11 : vector<128x128xf32>
    %cst_12 = arith.constant 0.000000e+00 : f32
    %13 = vector.broadcast %cst_12 : f32 to vector<128x128xf32>
    %14 = arith.maximumf %12, %13 : vector<128x128xf32>
    %15 = arith.truncf %14 : vector<128x128xf32> to vector<128x128xbf16>
    %cst_13 = arith.constant dense<0.000000e+00> : vector<128x128xf32>
    %16 = tpu.matmul %15, %2, %cst_13 {dimension_numbers = #tpu.dot_dimension_numbers<[1], [0], [0], [1], [0, 0, 1, 1], [], []>} : vector<128x128xbf16>, vector<128x128xbf16>, vector<128x128xf32> -> vector<128x128xf32>
    %17 = vector.broadcast %3 : vector<1x128xf32> to vector<128x128xf32>
    %18 = arith.addf %16, %17 : vector<128x128xf32>
    %cst_14 = arith.constant 0.000000e+00 : f32
    %19 = vector.broadcast %cst_14 : f32 to vector<128x128xf32>
    %20 = arith.maximumf %18, %19 : vector<128x128xf32>
    %21 = arith.truncf %20 : vector<128x128xf32> to vector<128x128xbf16>
    %cst_15 = arith.constant dense<0.000000e+00> : vector<128x10xf32>
    %22 = tpu.matmul %21, %4, %cst_15 {dimension_numbers = #tpu.dot_dimension_numbers<[1], [0], [0], [1], [0, 0, 1, 1], [], []>} : vector<128x128xbf16>, vector<128x10xbf16>, vector<128x10xf32> -> vector<128x10xf32>
    %23 = vector.broadcast %5 : vector<1x10xf32> to vector<128x10xf32>
    %24 = arith.addf %22, %23 : vector<128x10xf32>
    %25 = arith.index_cast %7 : i32 to index
    %c0_16 = arith.constant 0 : index
    %26 = vector.load %arg8[%25, %c0_16] : memref<128x10xf32, #tpu.memory_space<vmem>>, vector<128x10xf32>
    tpu.vector_store %arg8[%25, %c0_16], %24 {strides = array<i32>} : memref<128x10xf32, #tpu.memory_space<vmem>>, vector<128x10xf32>,
    %c1_i32 = arith.constant 1 : i32
    return
  }
  func.func @transform_0(%arg0: i32) -> (i32, i32) {
    %c0_i32 = arith.constant 0 : i32
    %c0_i32_0 = arith.constant 0 : i32
    return %arg0, %c0_i32 : i32, i32
  }
  func.func @transform_1(%arg0: i32) -> (i32, i32) {
    %c0_i32 = arith.constant 0 : i32
    %c0_i32_0 = arith.constant 0 : i32
    %c0_i32_1 = arith.constant 0 : i32
    return %c0_i32, %c0_i32_0 : i32, i32
  }
  func.func @transform_2(%arg0: i32) -> (i32, i32) {
    %c0_i32 = arith.constant 0 : i32
    %c0_i32_0 = arith.constant 0 : i32
    %c0_i32_1 = arith.constant 0 : i32
    return %c0_i32, %c0_i32_0 : i32, i32
  }
  func.func @transform_3(%arg0: i32) -> (i32, i32) {
    %c0_i32 = arith.constant 0 : i32
    %c0_i32_0 = arith.constant 0 : i32
    %c0_i32_1 = arith.constant 0 : i32
    return %c0_i32, %c0_i32_0 : i32, i32
  }
  func.func @transform_4(%arg0: i32) -> (i32, i32) {
    %c0_i32 = arith.constant 0 : i32
    %c0_i32_0 = arith.constant 0 : i32
    %c0_i32_1 = arith.constant 0 : i32
    return %c0_i32, %c0_i32_0 : i32, i32
  }
  func.func @transform_5(%arg0: i32) -> (i32, i32) {
    %c0_i32 = arith.constant 0 : i32
    %c0_i32_0 = arith.constant 0 : i32
    %c0_i32_1 = arith.constant 0 : i32
    return %c0_i32, %c0_i32_0 : i32, i32
  }
  func.func @transform_6(%arg0: i32) -> (i32, i32) {
    %c0_i32 = arith.constant 0 : i32
    %c0_i32_0 = arith.constant 0 : i32
    %c0_i32_1 = arith.constant 0 : i32
    return %c0_i32, %c0_i32_0 : i32, i32
  }
  func.func @transform_7(%arg0: i32) -> (i32, i32) {
    %c0_i32 = arith.constant 0 : i32
    %c0_i32_0 = arith.constant 0 : i32
    return %arg0, %c0_i32 : i32, i32
  }
}

</mosaic_0001>

<llo_original>
// kernel: linear_parameterizer_forward.1
$region0: #{linear_parameterizer_forward.1}
  #allocation0 [shape = 'u32[]', space=smem, size = 0x4, offset = 0x4, fixed_abs, tag = 'smem constant byte address 0x4 - core index']
  #allocation1 [shape = 'u32[144,128]{1,0:T(1,128)}', space=vmem, size = 0x12000, scoped, tag = 'internal scratch']
  %s0 = inlined_call_operand.vmem [shape: bf16[256,10], index: 0, kind: input, shape index: {}]
  %s1 = inlined_call_operand.vmem [shape: bf16[10,128], index: 1, kind: input, shape index: {}]
  %s2 = inlined_call_operand.vmem [shape: f32[1,128], index: 2, kind: input, shape index: {}]
  %s3 = inlined_call_operand.vmem [shape: bf16[128,128], index: 3, kind: input, shape index: {}]
  %s4 = inlined_call_operand.vmem [shape: f32[1,128], index: 4, kind: input, shape index: {}]
  %s5 = inlined_call_operand.vmem [shape: bf16[128,10], index: 5, kind: input, shape index: {}]
  %s6 = inlined_call_operand.vmem [shape: f32[1,10], index: 6, kind: input, shape index: {}]
  %s7 = inlined_call_operand.vmem [shape: f32[256,10], index: 7, kind: output, shape index: {}]
  %s8 = sld [smem:[#allocation0]]
  $region61: #{linear_parameterizer_forward.1} parent=0
    _
  %s10 = ssub.s32 1, %s8
  %s11 = scalar_select 0, %s10, %s8
  loop: start=0, step=1, limit=4
  $region2: #{linear_parameterizer_forward.1} parent=0 // loop_pre_header
    _
  $region3: #{linear_parameterizer_forward.1} parent=0 // loop_header
    %s13 = sphi 0, %s17
    %p14 = scmp.ge.s32.totalorder %s13, 4
    %s23 = sphi 0, %s25
    %s26 = sphi 0, %s23
    %s27 = sphi 0, %s26
    %s43 = sphi 0, %s27
    %s47 = sphi 0, %s47
    %s49 = sphi 0, %s47
    %s50 = sphi 0, %s49
    %s64 = sphi 0, %s50
    %s68 = sphi 0, %s68
    %s70 = sphi 0, %s68
    %s71 = sphi 0, %s70
    %s85 = sphi 0, %s71
    %s89 = sphi 0, %s89
    %s91 = sphi 0, %s89
    %s92 = sphi 0, %s91
    %s106 = sphi 0, %s92
    %s110 = sphi 0, %s110
    %s112 = sphi 0, %s110
    %s113 = sphi 0, %s112
    %s127 = sphi 0, %s113
    %s131 = sphi 0, %s131
    %s133 = sphi 0, %s131
    %s134 = sphi 0, %s133
    %s148 = sphi 0, %s134
    %s152 = sphi 0, %s152
    %s154 = sphi 0, %s152
    %s155 = sphi 0, %s154
    %s169 = sphi 0, %s155
    %s175 = sphi 0, %s177
    %s178 = sphi 0, %s175
    %s179 = sphi 0, %s178
    %s195 = sphi 0, %s179
  $region4: #{linear_parameterizer_forward.1} parent=0 // loop_header_branch
    %16 = sbr.rel (%p14) target = $region8
  $region5: #{linear_parameterizer_forward.1} parent=0 // loop_body
    %s18 = ssub.s32 %s13, 1
    %s19 = ssub.s32 %s13, 2
    %s20 = sadd.s32 %s13, 1
    %s21 = ssub.s32 %s13, %s20
    %p22 = scmp.eq.s32.totalorder %s21, 0
    %s24 = sadd.s32 %s23, 1
    %s25 = scalar_select %p22, %s23, %s24
    %p28 = pneg %p22
    %p29 = scmp.eq.s32.totalorder %s13, 1
    %p30 = por %p28, %p29
    %p31 = scmp.ne.s32.totalorder %s23, %s26
    %p32 = scmp.eq.s32.totalorder %s13, 0
    %p33 = por %p31, %p32
    %p34 = scmp.ne.s32.totalorder %s23, %s26
    %p35 = scmp.eq.s32.totalorder %s18, 1
    %p36 = por %p34, %p35
    %p37 = scmp.ne.s32.totalorder %s26, %s27
    %p38 = scmp.eq.s32.totalorder %s18, 0
    %p39 = por %p37, %p38
    %p40 = scmp.ne.s32.totalorder %s26, %s27
    %p41 = scmp.eq.s32.totalorder %s19, 1
    %p42 = por %p40, %p41
    %p44 = scmp.ne.s32.totalorder %s27, %s43
    %p45 = scmp.eq.s32.totalorder %s19, 0
    %p46 = por %p44, %p45
    %s48 = sadd.s32 %s47, 1
    %p51 = scmp.eq.s32.totalorder %s13, 1
    %p52 = scmp.ne.s32.totalorder %s47, %s49
    %p53 = scmp.eq.s32.totalorder %s13, 0
    %p54 = por %p52, %p53
    %p55 = scmp.ne.s32.totalorder %s47, %s49
    %p56 = scmp.eq.s32.totalorder %s18, 1
    %p57 = por %p55, %p56
    %p58 = scmp.ne.s32.totalorder %s49, %s50
    %p59 = scmp.eq.s32.totalorder %s18, 0
    %p60 = por %p58, %p59
    %p61 = scmp.ne.s32.totalorder %s49, %s50
    %p62 = scmp.eq.s32.totalorder %s19, 1
    %p63 = por %p61, %p62
    %p65 = scmp.ne.s32.totalorder %s50, %s64
    %p66 = scmp.eq.s32.totalorder %s19, 0
    %p67 = por %p65, %p66
    %s69 = sadd.s32 %s68, 1
    %p72 = scmp.eq.s32.totalorder %s13, 1
    %p73 = scmp.ne.s32.totalorder %s68, %s70
    %p74 = scmp.eq.s32.totalorder %s13, 0
    %p75 = por %p73, %p74
    %p76 = scmp.ne.s32.totalorder %s68, %s70
    %p77 = scmp.eq.s32.totalorder %s18, 1
    %p78 = por %p76, %p77
    %p79 = scmp.ne.s32.totalorder %s70, %s71
    %p80 = scmp.eq.s32.totalorder %s18, 0
    %p81 = por %p79, %p80
    %p82 = scmp.ne.s32.totalorder %s70, %s71
    %p83 = scmp.eq.s32.totalorder %s19, 1
    %p84 = por %p82, %p83
    %p86 = scmp.ne.s32.totalorder %s71, %s85
    %p87 = scmp.eq.s32.totalorder %s19, 0
    %p88 = por %p86, %p87
    %s90 = sadd.s32 %s89, 1
    %p93 = scmp.eq.s32.totalorder %s13, 1
    %p94 = scmp.ne.s32.totalorder %s89, %s91
    %p95 = scmp.eq.s32.totalorder %s13, 0
    %p96 = por %p94, %p95
    %p97 = scmp.ne.s32.totalorder %s89, %s91
    %p98 = scmp.eq.s32.totalorder %s18, 1
    %p99 = por %p97, %p98
    %p100 = scmp.ne.s32.totalorder %s91, %s92
    %p101 = scmp.eq.s32.totalorder %s18, 0
    %p102 = por %p100, %p101
    %p103 = scmp.ne.s32.totalorder %s91, %s92
    %p104 = scmp.eq.s32.totalorder %s19, 1
    %p105 = por %p103, %p104
    %p107 = scmp.ne.s32.totalorder %s92, %s106
    %p108 = scmp.eq.s32.totalorder %s19, 0
    %p109 = por %p107, %p108
    %s111 = sadd.s32 %s110, 1
    %p114 = scmp.eq.s32.totalorder %s13, 1
    %p115 = scmp.ne.s32.totalorder %s110, %s112
    %p116 = scmp.eq.s32.totalorder %s13, 0
    %p117 = por %p115, %p116
    %p118 = scmp.ne.s32.totalorder %s110, %s112
    %p119 = scmp.eq.s32.totalorder %s18, 1
    %p120 = por %p118, %p119
    %p121 = scmp.ne.s32.totalorder %s112, %s113
    %p122 = scmp.eq.s32.totalorder %s18, 0
    %p123 = por %p121, %p122
    %p124 = scmp.ne.s32.totalorder %s112, %s113
    %p125 = scmp.eq.s32.totalorder %s19, 1
    %p126 = por %p124, %p125
    %p128 = scmp.ne.s32.totalorder %s113, %s127
    %p129 = scmp.eq.s32.totalorder %s19, 0
    %p130 = por %p128, %p129
    %s132 = sadd.s32 %s131, 1
    %p135 = scmp.eq.s32.totalorder %s13, 1
    %p136 = scmp.ne.s32.totalorder %s131, %s133
    %p137 = scmp.eq.s32.totalorder %s13, 0
    %p138 = por %p136, %p137
    %p139 = scmp.ne.s32.totalorder %s131, %s133
    %p140 = scmp.eq.s32.totalorder %s18, 1
    %p141 = por %p139, %p140
    %p142 = scmp.ne.s32.totalorder %s133, %s134
    %p143 = scmp.eq.s32.totalorder %s18, 0
    %p144 = por %p142, %p143
    %p145 = scmp.ne.s32.totalorder %s133, %s134
    %p146 = scmp.eq.s32.totalorder %s19, 1
    %p147 = por %p145, %p146
    %p149 = scmp.ne.s32.totalorder %s134, %s148
    %p150 = scmp.eq.s32.totalorder %s19, 0
    %p151 = por %p149, %p150
    %s153 = sadd.s32 %s152, 1
    %p156 = scmp.eq.s32.totalorder %s13, 1
    %p157 = scmp.ne.s32.totalorder %s152, %s154
    %p158 = scmp.eq.s32.totalorder %s13, 0
    %p159 = por %p157, %p158
    %p160 = scmp.ne.s32.totalorder %s152, %s154
    %p161 = scmp.eq.s32.totalorder %s18, 1
    %p162 = por %p160, %p161
    %p163 = scmp.ne.s32.totalorder %s154, %s155
    %p164 = scmp.eq.s32.totalorder %s18, 0
    %p165 = por %p163, %p164
    %p166 = scmp.ne.s32.totalorder %s154, %s155
    %p167 = scmp.eq.s32.totalorder %s19, 1
    %p168 = por %p166, %p167
    %p170 = scmp.ne.s32.totalorder %s155, %s169
    %p171 = scmp.eq.s32.totalorder %s19, 0
    %p172 = por %p170, %p171
    %s173 = ssub.s32 %s13, %s20
    %p174 = scmp.eq.s32.totalorder %s173, 0
    %s176 = sadd.s32 %s175, 1
    %s177 = scalar_select %p174, %s175, %s176
    %p180 = pneg %p174
    %p181 = scmp.eq.s32.totalorder %s13, 1
    %p182 = por %p180, %p181
    %p183 = scmp.ne.s32.totalorder %s175, %s178
    %p184 = scmp.eq.s32.totalorder %s13, 0
    %p185 = por %p183, %p184
    %p186 = scmp.ne.s32.totalorder %s175, %s178
    %p187 = scmp.eq.s32.totalorder %s18, 1
    %p188 = por %p186, %p187
    %p189 = scmp.ne.s32.totalorder %s178, %s179
    %p190 = scmp.eq.s32.totalorder %s18, 0
    %p191 = por %p189, %p190
    %p192 = scmp.ne.s32.totalorder %s178, %s179
    %p193 = scmp.eq.s32.totalorder %s19, 1
    %p194 = por %p192, %p193
    %p196 = scmp.ne.s32.totalorder %s179, %s195
    %p197 = scmp.eq.s32.totalorder %s19, 0
    %p198 = por %p196, %p197
    %p199 = scmp.le.s32.totalorder 1, %s13
    %p200 = scmp.lt.s32.totalorder %s13, 3
    %p201 = pnand %p199, %p200
    %p202 = pneg %p201
    // Predicated region
    $region9: #{linear_parameterizer_forward.1} parent=5 // pred_check
      _
    $region10: #{linear_parameterizer_forward.1} parent=5 // pred_check_branch
      %204 = sbr.rel (%p201) target = $region12
    $region11: #{linear_parameterizer_forward.1} parent=5 // pred_region
      %s205 = ssub.s32 %s13, 1
      // Predicated region
      $region13: #{linear_parameterizer_forward.1} parent=11 // pred_check
        %p206 = pneg %p60
      $region14: #{linear_parameterizer_forward.1} parent=11 // pred_check_branch
        %208 = sbr.rel (%p206) target = $region16
      $region15: #{linear_parameterizer_forward.1} parent=11 // pred_region
        _
      $region16: #{linear_parameterizer_forward.1} parent=11 // pred_fallthru
        _
      // Predicated region
      $region17: #{linear_parameterizer_forward.1} parent=11 // pred_check
        %p209 = pneg %p81
      $region18: #{linear_parameterizer_forward.1} parent=11 // pred_check_branch
        %211 = sbr.rel (%p209) target = $region20
      $region19: #{linear_parameterizer_forward.1} parent=11 // pred_region
        _
      $region20: #{linear_parameterizer_forward.1} parent=11 // pred_fallthru
        _
      // Predicated region
      $region21: #{linear_parameterizer_forward.1} parent=11 // pred_check
        %p212 = pneg %p102
      $region22: #{linear_parameterizer_forward.1} parent=11 // pred_check_branch
        %214 = sbr.rel (%p212) target = $region24
      $region23: #{linear_parameterizer_forward.1} parent=11 // pred_region
        _
      $region24: #{linear_parameterizer_forward.1} parent=11 // pred_fallthru
        _
      // Predicated region
      $region25: #{linear_parameterizer_forward.1} parent=11 // pred_check
        %p215 = pneg %p123
      $region26: #{linear_parameterizer_forward.1} parent=11 // pred_check_branch
        %217 = sbr.rel (%p215) target = $region28
      $region27: #{linear_parameterizer_forward.1} parent=11 // pred_region
        _
      $region28: #{linear_parameterizer_forward.1} parent=11 // pred_fallthru
        _
      // Predicated region
      $region29: #{linear_parameterizer_forward.1} parent=11 // pred_check
        %p218 = pneg %p144
      $region30: #{linear_parameterizer_forward.1} parent=11 // pred_check_branch
        %220 = sbr.rel (%p218) target = $region32
      $region31: #{linear_parameterizer_forward.1} parent=11 // pred_region
        _
      $region32: #{linear_parameterizer_forward.1} parent=11 // pred_fallthru
        _
      // Predicated region
      $region33: #{linear_parameterizer_forward.1} parent=11 // pred_check
        %p221 = pneg %p165
      $region34: #{linear_parameterizer_forward.1} parent=11 // pred_check_branch
        %223 = sbr.rel (%p221) target = $region36
      $region35: #{linear_parameterizer_forward.1} parent=11 // pred_region
        _
      $region36: #{linear_parameterizer_forward.1} parent=11 // pred_fallthru
        _
    $region12: #{linear_parameterizer_forward.1} parent=5 // pred_fallthru
      _
    %p224 = scmp.lt.s32.totalorder %s13, 2
    // Predicated region
    $region37: #{linear_parameterizer_forward.1} parent=5 // pred_check
      %p225 = pneg %p224
    $region38: #{linear_parameterizer_forward.1} parent=5 // pred_check_branch
      %227 = sbr.rel (%p225) target = $region40
    $region39: #{linear_parameterizer_forward.1} parent=5 // pred_region
      // Predicated region
      $region41: #{linear_parameterizer_forward.1} parent=39 // pred_check
        %p228 = pneg %p33
      $region42: #{linear_parameterizer_forward.1} parent=39 // pred_check_branch
        %230 = sbr.rel (%p228) target = $region44
      $region43: #{linear_parameterizer_forward.1} parent=39 // pred_region
        %s231 = smul.u32 16, %s13
        %p232 = scmp.lt.s32.totalorder %s231, 31
        %s233 = scalar_select %p232, %s231, 31
        %s234 = smul.addr %s233, 4
        %s235 = scalar_lea.vmem %s0, %s234
        %s236 = smul.u32 16, %s13
      $region44: #{linear_parameterizer_forward.1} parent=39 // pred_fallthru
        _
    $region40: #{linear_parameterizer_forward.1} parent=5 // pred_fallthru
      _
    %p237 = scmp.le.s32.totalorder 1, %s13
    %p238 = scmp.lt.s32.totalorder %s13, 3
    %p239 = pnand %p237, %p238
    %p240 = pneg %p239
    // Predicated region
    $region45: #{linear_parameterizer_forward.1} parent=5 // pred_check
      _
    $region46: #{linear_parameterizer_forward.1} parent=5 // pred_check_branch
      %242 = sbr.rel (%p239) target = $region48
    $region47: #{linear_parameterizer_forward.1} parent=5 // pred_region
      %s243 = ssub.s32 %s13, 1
      %s244 = smul.u32 16, %s18
      %p245 = scmp.lt.s32.totalorder %s244, 31
      %s246 = scalar_select %p245, %s244, 31
      %s247 = smul.addr %s246, 4
      %s248 = scalar_lea.vmem %s0, %s247
      %p249 = pneg %p39
      %p250 = pneg %p36
      %p251 = pneg %p60
      %p252 = pneg %p57
      %p253 = pneg %p81
      %p254 = pneg %p78
      %p255 = pneg %p102
      %p256 = pneg %p99
      %p257 = pneg %p123
      %p258 = pneg %p120
      %p259 = pneg %p144
      %p260 = pneg %p141
      %p261 = pneg %p165
      %p262 = pneg %p162
      %p263 = pneg %p191
      %p264 = pneg %p188
      %s265 = smul.u32 16, %s18
      %p266 = scmp.lt.s32.totalorder %s265, 31
      %s267 = scalar_select %p266, %s265, 31
      %s268 = smul.addr %s267, 8
      %s269 = scalar_lea.vmem %s7, %s268
      %s270 = smul.u32 16, %s18
      %p271 = scmp.lt.s32.totalorder %s270, 31
      %s272 = scalar_select %p271, %s270, 31
      %s273 = smul.addr %s272, 4
      %s274 = scalar_lea.vmem %s0, %s273
      %s275 = smul.u32 16, %s18
      %s276 = smul.u32 16, %s18
      %p277 = scmp.lt.s32.totalorder %s276, 31
      %s278 = scalar_select %p277, %s276, 31
      %s279 = smul.addr %s278, 8
      %s280 = scalar_lea.vmem %s7, %s279
      %s281 = smul.u32 16, %s18
      %v283 = vld [vmem:[%s1] sm:$0xf]
      %v284 = vld [vmem:[%s1 + $0x4] sm:$0x1]
      %v285 = vld [vmem:[%s2] sm:$0x1]
      %v286 = vld [vmem:[%s3] sm:$0xf]
      %v287 = vld [vmem:[%s3 + $0x4] sm:$0xf]
      %v288 = vld [vmem:[%s3 + $0x8] sm:$0xf]
      %v289 = vld [vmem:[%s3 + $0xc] sm:$0xf]
      %v290 = vld [vmem:[%s3 + $0x10] sm:$0xf]
      %v291 = vld [vmem:[%s3 + $0x14] sm:$0xf]
      %v292 = vld [vmem:[%s3 + $0x18] sm:$0xf]
      %v293 = vld [vmem:[%s3 + $0x1c] sm:$0xf]
      %v294 = vld [vmem:[%s3 + $0x20] sm:$0xf]
      %v295 = vld [vmem:[%s3 + $0x24] sm:$0xf]
      %v296 = vld [vmem:[%s3 + $0x28] sm:$0xf]
      %v297 = vld [vmem:[%s3 + $0x2c] sm:$0xf]
      %v298 = vld [vmem:[%s3 + $0x30] sm:$0xf]
      %v299 = vld [vmem:[%s3 + $0x34] sm:$0xf]
      %v300 = vld [vmem:[%s3 + $0x38] sm:$0xf]
      %v301 = vld [vmem:[%s3 + $0x3c] sm:$0xf]
      %v302 = vld [vmem:[%s4] sm:$0x1]
      %v303 = vld [vmem:[%s5] sm:$0xf]
      %v304 = vld [vmem:[%s5 + $0x4] sm:$0xf]
      %v305 = vld [vmem:[%s5 + $0x8] sm:$0xf]
      %v306 = vld [vmem:[%s5 + $0xc] sm:$0xf]
      %v307 = vld [vmem:[%s5 + $0x10] sm:$0xf]
      %v308 = vld [vmem:[%s5 + $0x14] sm:$0xf]
      %v309 = vld [vmem:[%s5 + $0x18] sm:$0xf]
      %v310 = vld [vmem:[%s5 + $0x1c] sm:$0xf]
      %v311 = vld [vmem:[%s5 + $0x20] sm:$0xf]
      %v312 = vld [vmem:[%s5 + $0x24] sm:$0xf]
      %v313 = vld [vmem:[%s5 + $0x28] sm:$0xf]
      %v314 = vld [vmem:[%s5 + $0x2c] sm:$0xf]
      %v315 = vld [vmem:[%s5 + $0x30] sm:$0xf]
      %v316 = vld [vmem:[%s5 + $0x34] sm:$0xf]
      %v317 = vld [vmem:[%s5 + $0x38] sm:$0xf]
      %v318 = vld [vmem:[%s5 + $0x3c] sm:$0xf]
      %v319 = vld [vmem:[%s6] sm:$0x1]
      %v320 = vld [vmem:[%s274] sm:$0xf]
      %v321 = vld [vmem:[%s274 + $0x4] sm:$0xf]
      %v322 = vld [vmem:[%s274 + $0x8] sm:$0xf]
      %v323 = vld [vmem:[%s274 + $0xc] sm:$0xf]
      %v324 = vld [vmem:[%s274 + $0x10] sm:$0xf]
      %v325 = vld [vmem:[%s274 + $0x14] sm:$0xf]
      %v326 = vld [vmem:[%s274 + $0x18] sm:$0xf]
      %v327 = vld [vmem:[%s274 + $0x1c] sm:$0xf]
      %v328 = vld [vmem:[%s274 + $0x20] sm:$0xf]
      %v329 = vld [vmem:[%s274 + $0x24] sm:$0xf]
      %v330 = vld [vmem:[%s274 + $0x28] sm:$0xf]
      %v331 = vld [vmem:[%s274 + $0x2c] sm:$0xf]
      %v332 = vld [vmem:[%s274 + $0x30] sm:$0xf]
      %v333 = vld [vmem:[%s274 + $0x34] sm:$0xf]
      %v334 = vld [vmem:[%s274 + $0x38] sm:$0xf]
      %v335 = vld [vmem:[%s274 + $0x3c] sm:$0xf]
      %v337 = vlaneseq
      %v338 = vshrl.u32 %v337, 7
      %v339 = vsub.s32 0, %v338
      %v340 = vrot.slane %v285, %v339
      %v358 = vunpack.c.l.b16 %v320
      %v359 = vunpack.c.l.b16 %v321
      %v360 = vunpack.c.l.b16 %v322
      %v361 = vunpack.c.l.b16 %v323
      %v362 = vunpack.c.l.b16 %v324
      %v363 = vunpack.c.l.b16 %v325
      %v364 = vunpack.c.l.b16 %v326
      %v365 = vunpack.c.l.b16 %v327
      %v366 = vunpack.c.l.b16 %v328
      %v367 = vunpack.c.l.b16 %v329
      %v368 = vunpack.c.l.b16 %v330
      %v369 = vunpack.c.l.b16 %v331
      %v370 = vunpack.c.l.b16 %v332
      %v371 = vunpack.c.l.b16 %v333
      %v372 = vunpack.c.l.b16 %v334
      %v373 = vunpack.c.l.b16 %v335
      %v374 = vpack.c.b16 %v359, %v358
      %v375 = vpack.c.b16 %v361, %v360
      %v376 = vpack.c.b16 %v363, %v362
      %v377 = vpack.c.b16 %v365, %v364
      %v378 = vpack.c.b16 %v367, %v366
      %v379 = vpack.c.b16 %v369, %v368
      %v380 = vpack.c.b16 %v371, %v370
      %v381 = vpack.c.b16 %v373, %v372
      %v384 = vunpack.c.l.b16 %v283
      %v385 = vunpack.c.l.b16 %v284
      %v386 = vpack.c.b16 %v385, %v384
      %vm387 = vcmask 80896
      %v389 = vsel %vm387, %v374, 0
      %v392 = vsel %vm387, %v375, 0
      %v395 = vsel %vm387, %v376, 0
      %v398 = vsel %vm387, %v377, 0
      %v401 = vsel %vm387, %v378, 0
      %v404 = vsel %vm387, %v379, 0
      %v407 = vsel %vm387, %v380, 0
      %v410 = vsel %vm387, %v381, 0
      %vm412 = vcmask 1044480
      %v414 = vsel %vm412, %v386, 0
      %416 = vmatprep.subr.bf16.mxu0 0
      %417 = vmatpush1.bf16.msra.mxu0 0
      %418 = vmatprep.subr.bf16.mxu0 0
      %419 = vmatpush1.bf16.msra.mxu0 0
      %420 = vmatprep.subr.bf16.mxu0 0
      %421 = vmatpush1.bf16.msra.mxu0 0
      %422 = vmatprep.subr.bf16.mxu0 0
      %423 = vmatpush1.bf16.msra.mxu0 0
      %424 = vmatprep.subr.bf16.mxu0 0
      %425 = vmatpush1.bf16.msra.mxu0 0
      %426 = vmatprep.subr.bf16.mxu0 0
      %427 = vmatpush1.bf16.msra.mxu0 0
      %428 = vmatprep.subr.bf16.mxu0 0
      %429 = vmatpush1.bf16.msra.mxu0 0
      %430 = vmatprep.subr.bf16.mxu0 0
      %431 = vmatpush1.bf16.msra.mxu0 %v414
      %432 = vmatprep.subr.bf16.mxu0 0
      %433 = vmatpush2.bf16.msra.mxu0 0
      %434 = vmatprep.subr.bf16.mxu0 0
      %435 = vmatpush2.bf16.msra.mxu0 0
      %436 = vmatprep.subr.bf16.mxu0 0
      %437 = vmatpush2.bf16.msra.mxu0 0
      %438 = vmatprep.subr.bf16.mxu0 0
      %439 = vmatpush2.bf16.msra.mxu0 0
      %440 = vmatprep.subr.bf16.mxu0 0
      %441 = vmatpush2.bf16.msra.mxu0 0
      %442 = vmatprep.subr.bf16.mxu0 0
      %443 = vmatpush2.bf16.msra.mxu0 0
      %444 = vmatprep.subr.bf16.mxu0 0
      %445 = vmatpush2.bf16.msra.mxu0 0
      %446 = vmatprep.subr.bf16.mxu0 0
      %447 = vmatpush2.bf16.msra.mxu0 0
      %448 = vmatprep.mubr.bf16.mxu0 0
      %449 = vmatmul.mubr.bf16.gmra.mxu0 %v389
      %v450 = vpop.f32.mrf.mxu0
      %v451 = vadd.f32 %v340, %v450
      %v452 = vpop.f32.mrf.mxu0
      %v453 = vpop.f32.mrf.mxu0
      %v454 = vadd.f32 %v340, %v453
      %v455 = vpop.f32.mrf.mxu0
      %456 = vmatprep.mubr.bf16.mxu0 0
      %457 = vmatmul.mubr.bf16.gmra.mxu0 %v392
      %v458 = vpop.f32.mrf.mxu0
      %v459 = vadd.f32 %v340, %v458
      %v460 = vpop.f32.mrf.mxu0
      %v461 = vpop.f32.mrf.mxu0
      %v462 = vadd.f32 %v340, %v461
      %v463 = vpop.f32.mrf.mxu0
      %464 = vmatprep.mubr.bf16.mxu0 0
      %465 = vmatmul.mubr.bf16.gmra.mxu0 %v395
      %v466 = vpop.f32.mrf.mxu0
      %v467 = vadd.f32 %v340, %v466
      %v468 = vpop.f32.mrf.mxu0
      %v469 = vpop.f32.mrf.mxu0
      %v470 = vadd.f32 %v340, %v469
      %v471 = vpop.f32.mrf.mxu0
      %472 = vmatprep.mubr.bf16.mxu0 0
      %473 = vmatmul.mubr.bf16.gmra.mxu0 %v398
      %v474 = vpop.f32.mrf.mxu0
      %v475 = vadd.f32 %v340, %v474
      %v476 = vpop.f32.mrf.mxu0
      %v477 = vpop.f32.mrf.mxu0
      %v478 = vadd.f32 %v340, %v477
      %v479 = vpop.f32.mrf.mxu0
      %480 = vmatprep.mubr.bf16.mxu0 0
      %481 = vmatmul.mubr.bf16.gmra.mxu0 %v401
      %v482 = vpop.f32.mrf.mxu0
      %v483 = vadd.f32 %v340, %v482
      %v484 = vpop.f32.mrf.mxu0
      %v485 = vpop.f32.mrf.mxu0
      %v486 = vadd.f32 %v340, %v485
      %v487 = vpop.f32.mrf.mxu0
      %488 = vmatprep.mubr.bf16.mxu0 0
      %489 = vmatmul.mubr.bf16.gmra.mxu0 %v404
      %v490 = vpop.f32.mrf.mxu0
      %v491 = vadd.f32 %v340, %v490
      %v492 = vpop.f32.mrf.mxu0
      %v493 = vpop.f32.mrf.mxu0
      %v494 = vadd.f32 %v340, %v493
      %v495 = vpop.f32.mrf.mxu0
      %496 = vmatprep.mubr.bf16.mxu0 0
      %497 = vmatmul.mubr.bf16.gmra.mxu0 %v407
      %v498 = vpop.f32.mrf.mxu0
      %v499 = vadd.f32 %v340, %v498
      %v500 = vpop.f32.mrf.mxu0
      %v501 = vpop.f32.mrf.mxu0
      %v502 = vadd.f32 %v340, %v501
      %v503 = vpop.f32.mrf.mxu0
      %504 = vmatprep.mubr.bf16.mxu0 0
      %505 = vmatmul.mubr.bf16.gmra.mxu0 %v410
      %v506 = vpop.f32.mrf.mxu0
      %v507 = vadd.f32 %v340, %v506
      %v508 = vpop.f32.mrf.mxu0
      %v509 = vpop.f32.mrf.mxu0
      %v510 = vadd.f32 %v340, %v509
      %v511 = vpop.f32.mrf.mxu0
      %512 = vdwg.mxu0
      %v513 = vmax.f32 %v451, 0.0
      %v514 = vmax.f32 %v454, 0.0
      %v515 = vmax.f32 %v459, 0.0
      %v516 = vmax.f32 %v462, 0.0
      %v517 = vmax.f32 %v467, 0.0
      %v518 = vmax.f32 %v470, 0.0
      %v519 = vmax.f32 %v475, 0.0
      %v520 = vmax.f32 %v478, 0.0
      %v521 = vmax.f32 %v483, 0.0
      %v522 = vmax.f32 %v486, 0.0
      %v523 = vmax.f32 %v491, 0.0
      %v524 = vmax.f32 %v494, 0.0
      %v525 = vmax.f32 %v499, 0.0
      %v526 = vmax.f32 %v502, 0.0
      %v527 = vmax.f32 %v507, 0.0
      %v528 = vmax.f32 %v510, 0.0
      %v529 = vpack.c.bf16 %v514, %v513
      %v530 = vpack.c.bf16 %v516, %v515
      %v531 = vpack.c.bf16 %v518, %v517
      %v532 = vpack.c.bf16 %v520, %v519
      %v533 = vpack.c.bf16 %v522, %v521
      %v534 = vpack.c.bf16 %v524, %v523
      %v535 = vpack.c.bf16 %v526, %v525
      %v536 = vpack.c.bf16 %v528, %v527
      %v538 = vlaneseq
      %v539 = vshrl.u32 %v538, 7
      %v540 = vsub.s32 0, %v539
      %v541 = vrot.slane %v302, %v540
      %v559 = vunpack.c.l.b16 %v286
      %v560 = vunpack.c.l.b16 %v287
      %v561 = vunpack.c.l.b16 %v288
      %v562 = vunpack.c.l.b16 %v289
      %v563 = vunpack.c.l.b16 %v290
      %v564 = vunpack.c.l.b16 %v291
      %v565 = vunpack.c.l.b16 %v292
      %v566 = vunpack.c.l.b16 %v293
      %v567 = vunpack.c.l.b16 %v294
      %v568 = vunpack.c.l.b16 %v295
      %v569 = vunpack.c.l.b16 %v296
      %v570 = vunpack.c.l.b16 %v297
      %v571 = vunpack.c.l.b16 %v298
      %v572 = vunpack.c.l.b16 %v299
      %v573 = vunpack.c.l.b16 %v300
      %v574 = vunpack.c.l.b16 %v301
      %v575 = vpack.c.b16 %v560, %v559
      %v576 = vpack.c.b16 %v562, %v561
      %v577 = vpack.c.b16 %v564, %v563
      %v578 = vpack.c.b16 %v566, %v565
      %v579 = vpack.c.b16 %v568, %v567
      %v580 = vpack.c.b16 %v570, %v569
      %v581 = vpack.c.b16 %v572, %v571
      %v582 = vpack.c.b16 %v574, %v573
      %591 = vmatprep.subr.bf16.mxu0 0
      %592 = vmatpush1.bf16.msra.mxu0 %v582
      %593 = vmatprep.subr.bf16.mxu0 0
      %594 = vmatpush1.bf16.msra.mxu0 %v581
      %595 = vmatprep.subr.bf16.mxu0 0
      %596 = vmatpush1.bf16.msra.mxu0 %v580
      %597 = vmatprep.subr.bf16.mxu0 0
      %598 = vmatpush1.bf16.msra.mxu0 %v579
      %599 = vmatprep.subr.bf16.mxu0 0
      %600 = vmatpush1.bf16.msra.mxu0 %v578
      %601 = vmatprep.subr.bf16.mxu0 0
      %602 = vmatpush1.bf16.msra.mxu0 %v577
      %603 = vmatprep.subr.bf16.mxu0 0
      %604 = vmatpush1.bf16.msra.mxu0 %v576
      %605 = vmatprep.subr.bf16.mxu0 0
      %606 = vmatpush1.bf16.msra.mxu0 %v575
      %607 = vmatprep.subr.bf16.mxu0 0
      %608 = vmatpush2.bf16.msra.mxu0 0
      %609 = vmatprep.subr.bf16.mxu0 0
      %610 = vmatpush2.bf16.msra.mxu0 0
      %611 = vmatprep.subr.bf16.mxu0 0
      %612 = vmatpush2.bf16.msra.mxu0 0
      %613 = vmatprep.subr.bf16.mxu0 0
      %614 = vmatpush2.bf16.msra.mxu0 0
      %615 = vmatprep.subr.bf16.mxu0 0
      %616 = vmatpush2.bf16.msra.mxu0 0
      %617 = vmatprep.subr.bf16.mxu0 0
      %618 = vmatpush2.bf16.msra.mxu0 0
      %619 = vmatprep.subr.bf16.mxu0 0
      %620 = vmatpush2.bf16.msra.mxu0 0
      %621 = vmatprep.subr.bf16.mxu0 0
      %622 = vmatpush2.bf16.msra.mxu0 0
      %623 = vmatprep.mubr.bf16.mxu0 0
      %624 = vmatmul.mubr.bf16.gmra.mxu0 %v529
      %v625 = vpop.f32.mrf.mxu0
      %v626 = vadd.f32 %v541, %v625
      %v627 = vpop.f32.mrf.mxu0
      %v628 = vpop.f32.mrf.mxu0
      %v629 = vadd.f32 %v541, %v628
      %v630 = vpop.f32.mrf.mxu0
      %631 = vmatprep.mubr.bf16.mxu0 0
      %632 = vmatmul.mubr.bf16.gmra.mxu0 %v530
      %v633 = vpop.f32.mrf.mxu0
      %v634 = vadd.f32 %v541, %v633
      %v635 = vpop.f32.mrf.mxu0
      %v636 = vpop.f32.mrf.mxu0
      %v637 = vadd.f32 %v541, %v636
      %v638 = vpop.f32.mrf.mxu0
      %639 = vmatprep.mubr.bf16.mxu0 0
      %640 = vmatmul.mubr.bf16.gmra.mxu0 %v531
      %v641 = vpop.f32.mrf.mxu0
      %v642 = vadd.f32 %v541, %v641
      %v643 = vpop.f32.mrf.mxu0
      %v644 = vpop.f32.mrf.mxu0
      %v645 = vadd.f32 %v541, %v644
      %v646 = vpop.f32.mrf.mxu0
      %647 = vmatprep.mubr.bf16.mxu0 0
      %648 = vmatmul.mubr.bf16.gmra.mxu0 %v532
      %v649 = vpop.f32.mrf.mxu0
      %v650 = vadd.f32 %v541, %v649
      %v651 = vpop.f32.mrf.mxu0
      %v652 = vpop.f32.mrf.mxu0
      %v653 = vadd.f32 %v541, %v652
      %v654 = vpop.f32.mrf.mxu0
      %655 = vmatprep.mubr.bf16.mxu0 0
      %656 = vmatmul.mubr.bf16.gmra.mxu0 %v533
      %v657 = vpop.f32.mrf.mxu0
      %v658 = vadd.f32 %v541, %v657
      %v659 = vpop.f32.mrf.mxu0
      %v660 = vpop.f32.mrf.mxu0
      %v661 = vadd.f32 %v541, %v660
      %v662 = vpop.f32.mrf.mxu0
      %663 = vmatprep.mubr.bf16.mxu0 0
      %664 = vmatmul.mubr.bf16.gmra.mxu0 %v534
      %v665 = vpop.f32.mrf.mxu0
      %v666 = vadd.f32 %v541, %v665
      %v667 = vpop.f32.mrf.mxu0
      %v668 = vpop.f32.mrf.mxu0
      %v669 = vadd.f32 %v541, %v668
      %v670 = vpop.f32.mrf.mxu0
      %671 = vmatprep.mubr.bf16.mxu0 0
      %672 = vmatmul.mubr.bf16.gmra.mxu0 %v535
      %v673 = vpop.f32.mrf.mxu0
      %v674 = vadd.f32 %v541, %v673
      %v675 = vpop.f32.mrf.mxu0
      %v676 = vpop.f32.mrf.mxu0
      %v677 = vadd.f32 %v541, %v676
      %v678 = vpop.f32.mrf.mxu0
      %679 = vmatprep.mubr.bf16.mxu0 0
      %680 = vmatmul.mubr.bf16.gmra.mxu0 %v536
      %v681 = vpop.f32.mrf.mxu0
      %v682 = vadd.f32 %v541, %v681
      %v683 = vpop.f32.mrf.mxu0
      %v684 = vpop.f32.mrf.mxu0
      %v685 = vadd.f32 %v541, %v684
      %v686 = vpop.f32.mrf.mxu0
      %687 = vdwg.mxu0
      %v688 = vmax.f32 %v626, 0.0
      %v689 = vmax.f32 %v629, 0.0
      %v690 = vmax.f32 %v634, 0.0
      %v691 = vmax.f32 %v637, 0.0
      %v692 = vmax.f32 %v642, 0.0
      %v693 = vmax.f32 %v645, 0.0
      %v694 = vmax.f32 %v650, 0.0
      %v695 = vmax.f32 %v653, 0.0
      %v696 = vmax.f32 %v658, 0.0
      %v697 = vmax.f32 %v661, 0.0
      %v698 = vmax.f32 %v666, 0.0
      %v699 = vmax.f32 %v669, 0.0
      %v700 = vmax.f32 %v674, 0.0
      %v701 = vmax.f32 %v677, 0.0
      %v702 = vmax.f32 %v682, 0.0
      %v703 = vmax.f32 %v685, 0.0
      %v704 = vpack.c.bf16 %v689, %v688
      %v705 = vpack.c.bf16 %v691, %v690
      %v706 = vpack.c.bf16 %v693, %v692
      %v707 = vpack.c.bf16 %v695, %v694
      %v708 = vpack.c.bf16 %v697, %v696
      %v709 = vpack.c.bf16 %v699, %v698
      %v710 = vpack.c.bf16 %v701, %v700
      %v711 = vpack.c.bf16 %v703, %v702
      %v713 = vlaneseq
      %v714 = vshrl.u32 %v713, 7
      %v715 = vsub.s32 0, %v714
      %v716 = vrot.slane %v319, %v715
      %v734 = vunpack.c.l.b16 %v303
      %v735 = vunpack.c.l.b16 %v304
      %v736 = vunpack.c.l.b16 %v305
      %v737 = vunpack.c.l.b16 %v306
      %v738 = vunpack.c.l.b16 %v307
      %v739 = vunpack.c.l.b16 %v308
      %v740 = vunpack.c.l.b16 %v309
      %v741 = vunpack.c.l.b16 %v310
      %v742 = vunpack.c.l.b16 %v311
      %v743 = vunpack.c.l.b16 %v312
      %v744 = vunpack.c.l.b16 %v313
      %v745 = vunpack.c.l.b16 %v314
      %v746 = vunpack.c.l.b16 %v315
      %v747 = vunpack.c.l.b16 %v316
      %v748 = vunpack.c.l.b16 %v317
      %v749 = vunpack.c.l.b16 %v318
      %v750 = vpack.c.b16 %v735, %v734
      %v751 = vpack.c.b16 %v737, %v736
      %v752 = vpack.c.b16 %v739, %v738
      %v753 = vpack.c.b16 %v741, %v740
      %v754 = vpack.c.b16 %v743, %v742
      %v755 = vpack.c.b16 %v745, %v744
      %v756 = vpack.c.b16 %v747, %v746
      %v757 = vpack.c.b16 %v749, %v748
      %766 = vmatprep.subr.bf16.mxu0 0
      %767 = vmatpush1.bf16.msra.mxu0 %v757
      %768 = vmatprep.subr.bf16.mxu0 0
      %769 = vmatpush1.bf16.msra.mxu0 %v756
      %770 = vmatprep.subr.bf16.mxu0 0
      %771 = vmatpush1.bf16.msra.mxu0 %v755
      %772 = vmatprep.subr.bf16.mxu0 0
      %773 = vmatpush1.bf16.msra.mxu0 %v754
      %774 = vmatprep.subr.bf16.mxu0 0
      %775 = vmatpush1.bf16.msra.mxu0 %v753
      %776 = vmatprep.subr.bf16.mxu0 0
      %777 = vmatpush1.bf16.msra.mxu0 %v752
      %778 = vmatprep.subr.bf16.mxu0 0
      %779 = vmatpush1.bf16.msra.mxu0 %v751
      %780 = vmatprep.subr.bf16.mxu0 0
      %781 = vmatpush1.bf16.msra.mxu0 %v750
      %782 = vmatprep.subr.bf16.mxu0 0
      %783 = vmatpush2.bf16.msra.mxu0 0
      %784 = vmatprep.subr.bf16.mxu0 0
      %785 = vmatpush2.bf16.msra.mxu0 0
      %786 = vmatprep.subr.bf16.mxu0 0
      %787 = vmatpush2.bf16.msra.mxu0 0
      %788 = vmatprep.subr.bf16.mxu0 0
      %789 = vmatpush2.bf16.msra.mxu0 0
      %790 = vmatprep.subr.bf16.mxu0 0
      %791 = vmatpush2.bf16.msra.mxu0 0
      %792 = vmatprep.subr.bf16.mxu0 0
      %793 = vmatpush2.bf16.msra.mxu0 0
      %794 = vmatprep.subr.bf16.mxu0 0
      %795 = vmatpush2.bf16.msra.mxu0 0
      %796 = vmatprep.subr.bf16.mxu0 0
      %797 = vmatpush2.bf16.msra.mxu0 0
      %798 = vmatprep.mubr.bf16.mxu0 0
      %799 = vmatmul.mubr.bf16.gmra.mxu0 %v704
      %v800 = vpop.f32.mrf.mxu0
      %v801 = vadd.f32 %v716, %v800
      %v802 = vpop.f32.mrf.mxu0
      %v803 = vpop.f32.mrf.mxu0
      %v804 = vadd.f32 %v716, %v803
      %v805 = vpop.f32.mrf.mxu0
      %806 = vmatprep.mubr.bf16.mxu0 0
      %807 = vmatmul.mubr.bf16.gmra.mxu0 %v705
      %v808 = vpop.f32.mrf.mxu0
      %v809 = vadd.f32 %v716, %v808
      %v810 = vpop.f32.mrf.mxu0
      %v811 = vpop.f32.mrf.mxu0
      %v812 = vadd.f32 %v716, %v811
      %v813 = vpop.f32.mrf.mxu0
      %814 = vmatprep.mubr.bf16.mxu0 0
      %815 = vmatmul.mubr.bf16.gmra.mxu0 %v706
      %v816 = vpop.f32.mrf.mxu0
      %v817 = vadd.f32 %v716, %v816
      %v818 = vpop.f32.mrf.mxu0
      %v819 = vpop.f32.mrf.mxu0
      %v820 = vadd.f32 %v716, %v819
      %v821 = vpop.f32.mrf.mxu0
      %822 = vmatprep.mubr.bf16.mxu0 0
      %823 = vmatmul.mubr.bf16.gmra.mxu0 %v707
      %v824 = vpop.f32.mrf.mxu0
      %v825 = vadd.f32 %v716, %v824
      %v826 = vpop.f32.mrf.mxu0
      %v827 = vpop.f32.mrf.mxu0
      %v828 = vadd.f32 %v716, %v827
      %v829 = vpop.f32.mrf.mxu0
      %830 = vmatprep.mubr.bf16.mxu0 0
      %831 = vmatmul.mubr.bf16.gmra.mxu0 %v708
      %v832 = vpop.f32.mrf.mxu0
      %v833 = vadd.f32 %v716, %v832
      %v834 = vpop.f32.mrf.mxu0
      %v835 = vpop.f32.mrf.mxu0
      %v836 = vadd.f32 %v716, %v835
      %v837 = vpop.f32.mrf.mxu0
      %838 = vmatprep.mubr.bf16.mxu0 0
      %839 = vmatmul.mubr.bf16.gmra.mxu0 %v709
      %v840 = vpop.f32.mrf.mxu0
      %v841 = vadd.f32 %v716, %v840
      %v842 = vpop.f32.mrf.mxu0
      %v843 = vpop.f32.mrf.mxu0
      %v844 = vadd.f32 %v716, %v843
      %v845 = vpop.f32.mrf.mxu0
      %846 = vmatprep.mubr.bf16.mxu0 0
      %847 = vmatmul.mubr.bf16.gmra.mxu0 %v710
      %v848 = vpop.f32.mrf.mxu0
      %v849 = vadd.f32 %v716, %v848
      %v850 = vpop.f32.mrf.mxu0
      %v851 = vpop.f32.mrf.mxu0
      %v852 = vadd.f32 %v716, %v851
      %v853 = vpop.f32.mrf.mxu0
      %854 = vmatprep.mubr.bf16.mxu0 0
      %855 = vmatmul.mubr.bf16.gmra.mxu0 %v711
      %v856 = vpop.f32.mrf.mxu0
      %v857 = vadd.f32 %v716, %v856
      %v858 = vpop.f32.mrf.mxu0
      %v859 = vpop.f32.mrf.mxu0
      %v860 = vadd.f32 %v716, %v859
      %v861 = vpop.f32.mrf.mxu0
      %862 = vdwg.mxu0
      %863 = vst.msk [vmem:[%s280] sm:$0xff] %vm387, %v801
      %864 = vst.msk [vmem:[%s280 + $0x8] sm:$0xff] %vm387, %v804
      %865 = vst.msk [vmem:[%s280 + $0x10] sm:$0xff] %vm387, %v809
      %866 = vst.msk [vmem:[%s280 + $0x18] sm:$0xff] %vm387, %v812
      %867 = vst.msk [vmem:[%s280 + $0x20] sm:$0xff] %vm387, %v817
      %868 = vst.msk [vmem:[%s280 + $0x28] sm:$0xff] %vm387, %v820
      %869 = vst.msk [vmem:[%s280 + $0x30] sm:$0xff] %vm387, %v825
      %870 = vst.msk [vmem:[%s280 + $0x38] sm:$0xff] %vm387, %v828
      %871 = vst.msk [vmem:[%s280 + $0x40] sm:$0xff] %vm387, %v833
      %872 = vst.msk [vmem:[%s280 + $0x48] sm:$0xff] %vm387, %v836
      %873 = vst.msk [vmem:[%s280 + $0x50] sm:$0xff] %vm387, %v841
      %874 = vst.msk [vmem:[%s280 + $0x58] sm:$0xff] %vm387, %v844
      %875 = vst.msk [vmem:[%s280 + $0x60] sm:$0xff] %vm387, %v849
      %876 = vst.msk [vmem:[%s280 + $0x68] sm:$0xff] %vm387, %v852
      %877 = vst.msk [vmem:[%s280 + $0x70] sm:$0xff] %vm387, %v857
      %878 = vst.msk [vmem:[%s280 + $0x78] sm:$0xff] %vm387, %v860
      %s879 = smul.u32 16, %s18
      %p880 = scmp.lt.s32.totalorder %s879, 31
      %s881 = scalar_select %p880, %s879, 31
      %s882 = smul.addr %s881, 8
      %s883 = scalar_lea.vmem %s7, %s882
      // Predicated region
      $region49: #{linear_parameterizer_forward.1} parent=47 // pred_check
        %p884 = pneg %p188
      $region50: #{linear_parameterizer_forward.1} parent=47 // pred_check_branch
        %886 = sbr.rel (%p884) target = $region52
      $region51: #{linear_parameterizer_forward.1} parent=47 // pred_region
        %s887 = smul.u32 16, %s18
      $region52: #{linear_parameterizer_forward.1} parent=47 // pred_fallthru
        _
    $region48: #{linear_parameterizer_forward.1} parent=5 // pred_fallthru
      _
    %p888 = scmp.le.s32.totalorder 2, %s13
    // Predicated region
    $region53: #{linear_parameterizer_forward.1} parent=5 // pred_check
      %p889 = pneg %p888
    $region54: #{linear_parameterizer_forward.1} parent=5 // pred_check_branch
      %891 = sbr.rel (%p889) target = $region56
    $region55: #{linear_parameterizer_forward.1} parent=5 // pred_region
      %s892 = ssub.s32 %s13, 2
      // Predicated region
      $region57: #{linear_parameterizer_forward.1} parent=55 // pred_check
        %p893 = pneg %p194
      $region58: #{linear_parameterizer_forward.1} parent=55 // pred_check_branch
        %895 = sbr.rel (%p893) target = $region60
      $region59: #{linear_parameterizer_forward.1} parent=55 // pred_region
        %s896 = smul.u32 16, %s19
        %p897 = scmp.lt.s32.totalorder %s896, 31
        %s898 = scalar_select %p897, %s896, 31
        %s899 = smul.addr %s898, 8
        %s900 = scalar_lea.vmem %s7, %s899
      $region60: #{linear_parameterizer_forward.1} parent=55 // pred_fallthru
        _
    $region56: #{linear_parameterizer_forward.1} parent=5 // pred_fallthru
      _
  $region6: #{linear_parameterizer_forward.1} parent=0 // loop_footer
    %s17 = sadd.s32 1, %s13
  $region7: #{linear_parameterizer_forward.1} parent=0 // loop_footer_branch
    %12 = sbr.rel target = $region3
  $region8: #{linear_parameterizer_forward.1} parent=0 // loop_exit
    _

</llo_original>
